<compile_context>
chip_gen: v6e
topology: v6e:2x2x1
jax: 0.10.0
libtpu: 0.0.40
codegen_flags: <defaults>
</compile_context>

<pallas_src>
import functools

import jax
import jax.numpy as jnp
from jax.experimental import pallas as pl
from jax.experimental.pallas import tpu as pltpu


# --------------------------------------------------------------------------- #
# Kernel
# --------------------------------------------------------------------------- #
def _molweight_kernel(m_ref, a1_ref, p2_ref, beta_ref, mcr_ref, kcr_ref, out_ref,
                      *, scalar_flags, use_coef):
    """Elementwise body. p2 is alpha_2, or the prefolded (alpha_2-alpha_1)/beta."""
    f32 = jnp.float32

    def read(ref, is_scalar):
        v = ref[0, 0] if is_scalar else ref[...]
        return v.astype(f32)

    M = m_ref[...].astype(f32)
    a1, p2, beta, mcr, kcr = (
        read(r, s) for r, s in zip(
            (a1_ref, p2_ref, beta_ref, mcr_ref, kcr_ref), scalar_flags))

    m_cent = M - mcr
    m_sc = beta * m_cent
    # log(1 + exp(-x)) + x == softplus(x), evaluated stably.
    softplus = jnp.maximum(m_sc, 0.0) + jnp.log1p(jnp.exp(-jnp.abs(m_sc)))
    if use_coef:
        coef = p2                      # (alpha_2 - alpha_1) / beta, wrapper-folded
    else:
        coef = (p2 - a1) / beta
    out_ref[...] = (a1 * m_cent + kcr + coef * softplus).astype(out_ref.dtype)
    # TODO(synk): the data-dependent `if (f_M > 2).any(): print(...)` debug branch
    # of the PyTorch module is a host-side side effect with no kernel equivalent.


# --------------------------------------------------------------------------- #
# Wrapper helpers
# --------------------------------------------------------------------------- #
def _vmem_capacity_bytes():
    try:
        return int(pltpu.get_tpu_info().vmem_capacity_bytes)
    except Exception:
        return 64 * 1024 * 1024  # conservative default: v7x per-TC VMEM


def _pick_flat_lanes(total):
    """Largest multiple-of-128 divisor of `total` (<= 8192), preferring one that
    leaves at least 8 rows after flattening."""
    best = None
    best_tall = None
    cand = 128
    while cand <= min(total, 8192):
        if total % cand == 0:
            best = cand
            if total // cand >= 8:
                best_tall = cand
        cand += 128
    return best_tall or best


def _classify(shape, R, F):
    if shape == (R, F):
        return "full"
    if shape == (1, 1):
        return "scalar"
    if shape == (1, F):
        return "row"
    raise ValueError(f"operand shape {shape} not broadcast-compatible with {(R, F)}")


def _make_spec(kind, tile_r, tile_f):
    if kind == "full":
        return pl.BlockSpec((tile_r, tile_f), lambda fj, ri: (ri, fj))
    if kind == "row":
        # Block index constant along the inner row axis -> Pallas re-issues this
        # tiny DMA only when the outer feature tile changes.
        return pl.BlockSpec((1, tile_f), lambda fj, ri: (0, fj))
    # scalar: whole (1, 1) array in SMEM, read via the free scalar path.
    return pl.BlockSpec(memory_space=pltpu.MemorySpace.SMEM)


def _choose_tiles(R, F, itemsize, n_full, n_row, vmem_cap):
    row_align = {1: 32, 2: 16}.get(itemsize, 8)
    tile_f = min(F, 8192) if F % 128 == 0 else F
    R_pad = -(-R // row_align) * row_align

    def down(x):
        return max(row_align, (x // row_align) * row_align)

    def up(x):
        return max(row_align, -(-x // row_align) * row_align)

    # ~1 MiB per operand block: measured HBM-roofline plateau; bigger blocks only
    # shrink the grid and remove DMA/compute overlap.
    tile_r = min(down((1 << 20) // max(1, tile_f * itemsize)), R_pad)
    if R_pad >= 8 * row_align:          # >=8 row tiles: pipeline + v7x 2-TC sharding
        tile_r = min(tile_r, down(-(-R_pad // 8)))
    elif R_pad >= 2 * row_align:        # at least 2 row tiles when possible
        tile_r = min(tile_r, up(-(-R_pad // 2)))

    def working_set(tr):
        return n_full * 2 * tr * tile_f * itemsize + n_row * 2 * tile_f * 4

    while working_set(tile_r) > vmem_cap and tile_r > row_align:
        tile_r = down(tile_r // 2)
    return tile_r, tile_f, working_set(tile_r)


# --------------------------------------------------------------------------- #
# Public entry point
# --------------------------------------------------------------------------- #
def molweight(M, alpha_1, alpha_2, beta, Mcr, kcr):
    """Elementwise MolWeight forward.

    M must be (R, F); the five parameters may be (R, F), (1, F) or (1, 1)."""
    if M.ndim != 2:
        raise ValueError("M must be 2-D (rows, features)")
    R, F = M.shape
    out_shape = (R, F)
    out_dtype = M.dtype

    # Fold (alpha_2 - alpha_1) / beta once in the wrapper when all three are
    # broadcast-shaped (tiny arrays) -> removes the per-element reciprocal.
    use_coef = all(tuple(p.shape) != (R, F) for p in (alpha_1, alpha_2, beta))
    if use_coef:
        p2 = (alpha_2.astype(jnp.float32) - alpha_1.astype(jnp.float32)) \
             / beta.astype(jnp.float32)
    else:
        p2 = alpha_2
    operands = [M, alpha_1, p2, beta, Mcr, kcr]
    shapes = [tuple(x.shape) for x in operands]
    for s in shapes:
        if s not in ((R, F), (1, F), (1, 1)):
            raise ValueError(f"operand shape {s} not broadcast-compatible with {(R, F)}")

    # Lane densification: flatten ragged F to a multiple-of-128 lane width when
    # no (1, F) row-vector parameter blocks it.
    def _is_row(s):
        return R > 1 and F > 1 and s == (1, F)

    flattened = False
    if F % 128 != 0 and (R * F) % 128 == 0 and not any(_is_row(s) for s in shapes):
        L = _pick_flat_lanes(R * F)
        if L is not None:
            new_r = (R * F) // L
            operands = [x.reshape(new_r, L) if tuple(x.shape) == (R, F) else x
                        for x in operands]
            R, F = new_r, L
            flattened = True

    kinds = [_classify(tuple(x.shape), R, F) for x in operands]
    # Sub-32-bit (1,1) scalars ride the SMEM scalar path as 32-bit values.
    operands = [x.astype(jnp.float32) if (k == "scalar" and x.dtype.itemsize < 4) else x
                for x, k in zip(operands, kinds)]

    n_full = sum(k == "full" for k in kinds) + 1          # + output stream
    n_row = sum(k == "row" for k in kinds)
    itemsize = jnp.dtype(out_dtype).itemsize

    vmem_cap = (_vmem_capacity_bytes() * 3) // 4          # 48 MiB on v7x, 96 on v5e/v6e
    tile_r, tile_f, working_set = _choose_tiles(R, F, itemsize, n_full, n_row, vmem_cap)
    vmem_limit = int(min(max(working_set * 3 // 2, 16 * 1024 * 1024), vmem_cap))

    grid = (pl.cdiv(F, tile_f), pl.cdiv(R, tile_r))       # feature tiles outer, rows inner
    in_specs = [_make_spec(k, tile_r, tile_f) for k in kinds]
    out_spec = pl.BlockSpec((tile_r, tile_f), lambda fj, ri: (ri, fj))
    scalar_flags = tuple(k == "scalar" for k in kinds[1:])

    kernel = functools.partial(_molweight_kernel,
                               scalar_flags=scalar_flags, use_coef=use_coef)
    out = pl.pallas_call(
        kernel,
        out_shape=jax.ShapeDtypeStruct((R, F), out_dtype),
        grid_spec=pl.GridSpec(grid=grid, in_specs=in_specs, out_specs=out_spec),
        compiler_params=pltpu.CompilerParams(
            dimension_semantics=("parallel", "parallel"),
            vmem_limit_bytes=vmem_limit,
        ),
    )(*operands)
    return out.reshape(out_shape) if flattened else out


# --------------------------------------------------------------------------- #
# Pure-JAX reference (mirrors the kernel's f32-internal compute)
# --------------------------------------------------------------------------- #
def molweight_ref(M, alpha_1, alpha_2, beta, Mcr, kcr):
    f32 = jnp.float32
    Mf = M.astype(f32)
    a1 = alpha_1.astype(f32)
    a2 = alpha_2.astype(f32)
    b = beta.astype(f32)
    mcr = Mcr.astype(f32)
    kc = kcr.astype(f32)
    m_cent = Mf - mcr
    m_sc = b * m_cent
    f = a1 * m_cent + kc + (a2 - a1) / b * jax.nn.softplus(m_sc)
    return f.astype(M.dtype)


if __name__ == "__main__":
    key = jax.random.PRNGKey(0)
    ks = jax.random.split(key, 16)

    def check(out, ref, tol, name):
        assert out.shape == ref.shape and out.dtype == ref.dtype, name
        assert jnp.allclose(out.astype(jnp.float32), ref.astype(jnp.float32),
                            atol=tol, rtol=tol), f"mismatch vs reference: {name}"

    # Case 1: all operands full (R, F) f32 — exactly like the original torch usage.
    R, F = 300, 128  # non-multiple-of-8 rows exercise the ragged tail
    M       = jax.random.normal(ks[0], (R, F), jnp.float32) * 2.0
    alpha_1 = jax.random.uniform(ks[1], (R, F), jnp.float32, minval=0.1, maxval=1.0)
    alpha_2 = jax.random.uniform(ks[2], (R, F), jnp.float32, minval=0.5, maxval=3.0)
    beta    = jax.random.uniform(ks[3], (R, F), jnp.float32, minval=0.5, maxval=2.0)
    Mcr     = jax.random.normal(ks[4], (R, F), jnp.float32) * 0.5
    kcr     = jax.random.normal(ks[5], (R, F), jnp.float32) * 0.1
    out = jax.block_until_ready(molweight(M, alpha_1, alpha_2, beta, Mcr, kcr))
    check(out, molweight_ref(M, alpha_1, alpha_2, beta, Mcr, kcr), 1e-5, "full f32")

    # Case 2: (1, F) broadcast parameters (coef prefolded, grid-invariant row blocks).
    a1_b  = jax.random.uniform(ks[6],  (1, F), jnp.float32, minval=0.1, maxval=1.0)
    a2_b  = jax.random.uniform(ks[7],  (1, F), jnp.float32, minval=0.5, maxval=3.0)
    b_b   = jax.random.uniform(ks[8],  (1, F), jnp.float32, minval=0.5, maxval=2.0)
    mcr_b = jax.random.normal(ks[9],  (1, F), jnp.float32) * 0.5
    kcr_b = jax.random.normal(ks[10], (1, F), jnp.float32) * 0.1
    out = jax.block_until_ready(molweight(M, a1_b, a2_b, b_b, mcr_b, kcr_b))
    check(out, molweight_ref(M, a1_b, a2_b, b_b, mcr_b, kcr_b), 1e-5, "broadcast rows")

    # Case 3: mixed (1, F) rows + (1, 1) SMEM scalars.
    b_s   = jnp.asarray([[1.3]], jnp.float32)
    mcr_s = jnp.asarray([[0.2]], jnp.float32)
    kcr_s = jnp.asarray([[-0.05]], jnp.float32)
    out = jax.block_until_ready(molweight(M, a1_b, a2_b, b_s, mcr_s, kcr_s))
    check(out, molweight_ref(M, a1_b, a2_b, b_s, mcr_s, kcr_s), 1e-5, "scalar params")

    # Case 4: ragged F (not a multiple of 128) — wrapper lane-densifies to 128-lane tiles.
    R2, F2 = 64, 96
    M2   = jax.random.normal(ks[11], (R2, F2), jnp.float32)
    a1_2 = jax.random.uniform(ks[12], (R2, F2), jnp.float32, minval=0.1, maxval=1.0)
    a2_2 = jax.random.uniform(ks[13], (R2, F2), jnp.float32, minval=0.5, maxval=3.0)
    b_2  = jax.random.uniform(ks[14], (R2, F2), jnp.float32, minval=0.5, maxval=2.0)
    out = jax.block_until_ready(molweight(M2, a1_2, a2_2, b_2, mcr_s, kcr_s))
    check(out, molweight_ref(M2, a1_2, a2_2, b_2, mcr_s, kcr_s), 1e-5, "ragged F flatten")

    # Case 5: bf16 I/O (f32 compute inside the kernel).
    Mb   = M.astype(jnp.bfloat16)
    a1b  = a1_b.astype(jnp.bfloat16)
    a2b  = a2_b.astype(jnp.bfloat16)
    bb   = b_b.astype(jnp.bfloat16)
    mcrb = mcr_b.astype(jnp.bfloat16)
    kcrb = kcr_b.astype(jnp.bfloat16)
    out = jax.block_until_ready(molweight(Mb, a1b, a2b, bb, mcrb, kcrb))
    check(out, molweight_ref(Mb, a1b, a2b, bb, mcrb, kcrb), 5e-2, "bf16 I/O")

    print("KERNEL_OK")
</pallas_src>

<mosaic_0001>
module attributes {stable_mosaic.version = 11 : i64} {
  func.func @_molweight_kernel(%arg0: i32, %arg1: i32, %arg2: memref<32x128xf32, #tpu.memory_space<vmem>>, %arg3: memref<32x128xf32, #tpu.memory_space<vmem>>, %arg4: memref<32x128xf32, #tpu.memory_space<vmem>>, %arg5: memref<32x128xf32, #tpu.memory_space<vmem>>, %arg6: memref<32x128xf32, #tpu.memory_space<vmem>>, %arg7: memref<32x128xf32, #tpu.memory_space<vmem>>, %arg8: memref<32x128xf32, #tpu.memory_space<vmem>>) attributes {dimension_semantics = [#tpu.dimension_semantics<parallel>, #tpu.dimension_semantics<parallel>], iteration_bounds = array<i64: 1, 10>, scalar_prefetch = 0 : i64, scratch_operands = 0 : i64, tpu.core_type = #tpu.core_type<tc>, window_params = [{transform_indices = @transform_0, window_bounds = array<i64: 32, 128>}, {transform_indices = @transform_1, window_bounds = array<i64: 32, 128>}, {transform_indices = @transform_2, window_bounds = array<i64: 32, 128>}, {transform_indices = @transform_3, window_bounds = array<i64: 32, 128>}, {transform_indices = @transform_4, window_bounds = array<i64: 32, 128>}, {transform_indices = @transform_5, window_bounds = array<i64: 32, 128>}, {transform_indices = @transform_6, window_bounds = array<i64: 32, 128>}]} {
    %c0 = arith.constant 0 : index
    %c0_0 = arith.constant 0 : index
    %0 = vector.load %arg2[%c0, %c0_0] : memref<32x128xf32, #tpu.memory_space<vmem>>, vector<32x128xf32>
    %c0_1 = arith.constant 0 : index
    %c0_2 = arith.constant 0 : index
    %1 = vector.load %arg3[%c0_1, %c0_2] : memref<32x128xf32, #tpu.memory_space<vmem>>, vector<32x128xf32>
    %c0_3 = arith.constant 0 : index
    %c0_4 = arith.constant 0 : index
    %2 = vector.load %arg4[%c0_3, %c0_4] : memref<32x128xf32, #tpu.memory_space<vmem>>, vector<32x128xf32>
    %c0_5 = arith.constant 0 : index
    %c0_6 = arith.constant 0 : index
    %3 = vector.load %arg5[%c0_5, %c0_6] : memref<32x128xf32, #tpu.memory_space<vmem>>, vector<32x128xf32>
    %c0_7 = arith.constant 0 : index
    %c0_8 = arith.constant 0 : index
    %4 = vector.load %arg6[%c0_7, %c0_8] : memref<32x128xf32, #tpu.memory_space<vmem>>, vector<32x128xf32>
    %c0_9 = arith.constant 0 : index
    %c0_10 = arith.constant 0 : index
    %5 = vector.load %arg7[%c0_9, %c0_10] : memref<32x128xf32, #tpu.memory_space<vmem>>, vector<32x128xf32>
    %6 = arith.subf %0, %4 : vector<32x128xf32>
    %7 = arith.mulf %3, %6 : vector<32x128xf32>
    %cst = arith.constant 0.000000e+00 : f32
    %8 = vector.broadcast %cst : f32 to vector<32x128xf32>
    %9 = arith.maximumf %7, %8 : vector<32x128xf32>
    %10 = math.absf %7 : vector<32x128xf32>
    %cst_11 = arith.constant 0.000000e+00 : f32
    %11 = vector.broadcast %cst_11 : f32 to vector<32x128xf32>
    %12 = arith.subf %11, %10 : vector<32x128xf32>
    %13 = math.exp %12 : vector<32x128xf32>
    %14 = math.log1p %13 : vector<32x128xf32>
    %15 = arith.addf %9, %14 : vector<32x128xf32>
    %16 = arith.subf %2, %1 : vector<32x128xf32>
    %17 = arith.divf %16, %3 : vector<32x128xf32>
    %18 = arith.mulf %1, %6 : vector<32x128xf32>
    %19 = arith.addf %18, %5 : vector<32x128xf32>
    %20 = arith.mulf %17, %15 : vector<32x128xf32>
    %21 = arith.addf %19, %20 : vector<32x128xf32>
    %c0_12 = arith.constant 0 : index
    %c0_13 = arith.constant 0 : index
    %22 = vector.load %arg8[%c0_12, %c0_13] : memref<32x128xf32, #tpu.memory_space<vmem>>, vector<32x128xf32>
    tpu.vector_store %arg8[%c0_12, %c0_13], %21 {strides = array<i32>} : memref<32x128xf32, #tpu.memory_space<vmem>>, vector<32x128xf32>,
    return
  }
  func.func @transform_0(%arg0: i32, %arg1: i32) -> (i32, i32) {
    %c0_i32 = arith.constant 0 : i32
    return %arg1, %arg0 : i32, i32
  }
  func.func @transform_1(%arg0: i32, %arg1: i32) -> (i32, i32) {
    %c0_i32 = arith.constant 0 : i32
    return %arg1, %arg0 : i32, i32
  }
  func.func @transform_2(%arg0: i32, %arg1: i32) -> (i32, i32) {
    %c0_i32 = arith.constant 0 : i32
    return %arg1, %arg0 : i32, i32
  }
  func.func @transform_3(%arg0: i32, %arg1: i32) -> (i32, i32) {
    %c0_i32 = arith.constant 0 : i32
    return %arg1, %arg0 : i32, i32
  }
  func.func @transform_4(%arg0: i32, %arg1: i32) -> (i32, i32) {
    %c0_i32 = arith.constant 0 : i32
    return %arg1, %arg0 : i32, i32
  }
  func.func @transform_5(%arg0: i32, %arg1: i32) -> (i32, i32) {
    %c0_i32 = arith.constant 0 : i32
    return %arg1, %arg0 : i32, i32
  }
  func.func @transform_6(%arg0: i32, %arg1: i32) -> (i32, i32) {
    %c0_i32 = arith.constant 0 : i32
    return %arg1, %arg0 : i32, i32
  }
}

</mosaic_0001>

<llo_original>
// kernel: tpu_custom_call.1
$region0: #{tpu_custom_call.1}
  #allocation0 [shape = 'u32[]', space=smem, size = 0x4, offset = 0x4, fixed_abs, tag = 'smem constant byte address 0x4 - core index']
  #allocation1 [shape = 'u32[144,128]{1,0:T(1,128)}', space=vmem, size = 0x12000, scoped, tag = 'internal scratch']
  %s0 = inlined_call_operand.hbm [shape: f32[300,128], index: 0, kind: input, shape index: {}]
  %s1 = inlined_call_operand.hbm [shape: f32[300,128], index: 1, kind: input, shape index: {}]
  %s2 = inlined_call_operand.hbm [shape: f32[300,128], index: 2, kind: input, shape index: {}]
  %s3 = inlined_call_operand.hbm [shape: f32[300,128], index: 3, kind: input, shape index: {}]
  %s4 = inlined_call_operand.hbm [shape: f32[300,128], index: 4, kind: input, shape index: {}]
  %s5 = inlined_call_operand.hbm [shape: f32[300,128], index: 5, kind: input, shape index: {}]
  %s6 = inlined_call_operand.hbm [shape: f32[300,128], index: 6, kind: output, shape index: {}]
  %s7 = sld [smem:[#allocation0]]
  $region81: #{tpu_custom_call.1} parent=0
    _
  %s9 = ssub.s32 1, %s7
  %s10 = scalar_select 0, %s9, %s7
  $region1: #{tpu_custom_call.1} parent=0
    #allocation2 [shape = 'u8[32768]{0}', space=vmem, size = 0x8000, scoped, tag = 'input window, operand 0']
    #allocation3 [shape = 's32[2]{0}', space=sflag, size = 0x8, scoped, tag = 'scoped memory for tpu_custom_call.1']
    #allocation4 [shape = 's32[2]{0}', space=sflag, size = 0x8, scoped, tag = 'scoped memory for tpu_custom_call.1']
    #allocation5 [shape = 'u8[32768]{0}', space=vmem, size = 0x8000, scoped, tag = 'input window, operand 1']
    #allocation6 [shape = 's32[2]{0}', space=sflag, size = 0x8, scoped, tag = 'scoped memory for tpu_custom_call.1']
    #allocation7 [shape = 'u8[32768]{0}', space=vmem, size = 0x8000, scoped, tag = 'input window, operand 2']
    #allocation8 [shape = 'u8[32768]{0}', space=vmem, size = 0x8000, scoped, tag = 'input window, operand 3']
    #allocation9 [shape = 's32[2]{0}', space=sflag, size = 0x8, scoped, tag = 'scoped memory for tpu_custom_call.1']
    #allocation10 [shape = 'u8[32768]{0}', space=vmem, size = 0x8000, scoped, tag = 'input window, operand 4']
    #allocation11 [shape = 'u8[32768]{0}', space=vmem, size = 0x8000, scoped, tag = 'input window, operand 5']
    #allocation12 [shape = 's32[2]{0}', space=sflag, size = 0x8, scoped, tag = 'scoped memory for tpu_custom_call.1']
    #allocation13 [shape = 'u8[32768]{0}', space=vmem, size = 0x8000, scoped, tag = 'output window, operand 0']
    %11 = vsyncpa [#allocation3], 0
    %s12 = scalar_lea.sflag [#allocation3], 1
    %13 = vsyncpa %s12, 0
    %14 = vsyncpa [#allocation6], 0
    %s15 = scalar_lea.sflag [#allocation6], 1
    %16 = vsyncpa %s15, 0
    %17 = vsyncpa [#allocation9], 0
    %s18 = scalar_lea.sflag [#allocation9], 1
    %19 = vsyncpa %s18, 0
    %20 = vsyncpa [#allocation12], 0
    %s21 = scalar_lea.sflag [#allocation12], 1
    %22 = vsyncpa %s21, 0
    %23 = vsyncpa [#allocation4], 0
    %s24 = scalar_lea.sflag [#allocation4], 1
    %25 = vsyncpa %s24, 0
    loop: start=0, step=1, limit=12
    $region2: #{tpu_custom_call.1} parent=1 // loop_pre_header
      _
    $region3: #{tpu_custom_call.1} parent=1 // loop_header
      %s27 = sphi 0, %s31
      %p28 = scmp.ge.s32.totalorder %s27, 12
      %s34 = sphi 0, %s46
      %s35 = sphi 0, %s42
      %s36 = sphi 0, %s34
      %s37 = sphi 0, %s35
      %s38 = sphi 0, %s36
      %s39 = sphi 0, %s37
      %s51 = sphi 0, %s53
      %s54 = sphi 0, %s51
      %s55 = sphi 0, %s54
      %s71 = sphi 0, %s55
      %s79 = sphi 0, %s81
      %s82 = sphi 0, %s79
      %s83 = sphi 0, %s82
      %s99 = sphi 0, %s83
      %s107 = sphi 0, %s109
      %s110 = sphi 0, %s107
      %s111 = sphi 0, %s110
      %s127 = sphi 0, %s111
      %s135 = sphi 0, %s137
      %s138 = sphi 0, %s135
      %s139 = sphi 0, %s138
      %s155 = sphi 0, %s139
      %s163 = sphi 0, %s165
      %s166 = sphi 0, %s163
      %s167 = sphi 0, %s166
      %s183 = sphi 0, %s167
      %s191 = sphi 0, %s193
      %s194 = sphi 0, %s191
      %s195 = sphi 0, %s194
      %s211 = sphi 0, %s195
      %s219 = sphi 0, %s221
      %s222 = sphi 0, %s219
      %s223 = sphi 0, %s222
      %s239 = sphi 0, %s223
    $region4: #{tpu_custom_call.1} parent=1 // loop_header_branch
      %30 = sbr.rel (%p28) target = $region8
    $region5: #{tpu_custom_call.1} parent=1 // loop_body
      %s32 = ssub.s32 %s27, 1
      %s33 = ssub.s32 %s27, 2
      %s40 = sadd.s32 1, %s35
      %p41 = scmp.ge.s32.totalorder %s40, 10
      %s42 = scalar_select %p41, 0, %s40
      %s43 = sadd.s32 1, %s34
      %s44 = scalar_select %p41, %s43, %s34
      %p45 = scmp.ge.s32.totalorder %s44, 1
      %s46 = scalar_select %p45, 0, %s44
      %s47 = ssub.s32 %s35, %s42
      %s48 = ssub.s32 %s34, %s46
      %s49 = sor.u32 %s47, %s48
      %p50 = scmp.eq.s32.totalorder %s49, 0
      %s52 = sadd.s32 %s51, 1
      %s53 = scalar_select %p50, %s51, %s52
      %p56 = pneg %p50
      %p57 = scmp.eq.s32.totalorder %s27, 9
      %p58 = por %p56, %p57
      %p59 = scmp.ne.s32.totalorder %s51, %s54
      %p60 = scmp.eq.s32.totalorder %s27, 0
      %p61 = por %p59, %p60
      %p62 = scmp.ne.s32.totalorder %s51, %s54
      %p63 = scmp.eq.s32.totalorder %s32, 9
      %p64 = por %p62, %p63
      %p65 = scmp.ne.s32.totalorder %s54, %s55
      %p66 = scmp.eq.s32.totalorder %s32, 0
      %p67 = por %p65, %p66
      %p68 = scmp.ne.s32.totalorder %s54, %s55
      %p69 = scmp.eq.s32.totalorder %s33, 9
      %p70 = por %p68, %p69
      %p72 = scmp.ne.s32.totalorder %s55, %s71
      %p73 = scmp.eq.s32.totalorder %s33, 0
      %p74 = por %p72, %p73
      %s75 = ssub.s32 %s35, %s42
      %s76 = ssub.s32 %s34, %s46
      %s77 = sor.u32 %s75, %s76
      %p78 = scmp.eq.s32.totalorder %s77, 0
      %s80 = sadd.s32 %s79, 1
      %s81 = scalar_select %p78, %s79, %s80
      %p84 = pneg %p78
      %p85 = scmp.eq.s32.totalorder %s27, 9
      %p86 = por %p84, %p85
      %p87 = scmp.ne.s32.totalorder %s79, %s82
      %p88 = scmp.eq.s32.totalorder %s27, 0
      %p89 = por %p87, %p88
      %p90 = scmp.ne.s32.totalorder %s79, %s82
      %p91 = scmp.eq.s32.totalorder %s32, 9
      %p92 = por %p90, %p91
      %p93 = scmp.ne.s32.totalorder %s82, %s83
      %p94 = scmp.eq.s32.totalorder %s32, 0
      %p95 = por %p93, %p94
      %p96 = scmp.ne.s32.totalorder %s82, %s83
      %p97 = scmp.eq.s32.totalorder %s33, 9
      %p98 = por %p96, %p97
      %p100 = scmp.ne.s32.totalorder %s83, %s99
      %p101 = scmp.eq.s32.totalorder %s33, 0
      %p102 = por %p100, %p101
      %s103 = ssub.s32 %s35, %s42
      %s104 = ssub.s32 %s34, %s46
      %s105 = sor.u32 %s103, %s104
      %p106 = scmp.eq.s32.totalorder %s105, 0
      %s108 = sadd.s32 %s107, 1
      %s109 = scalar_select %p106, %s107, %s108
      %p112 = pneg %p106
      %p113 = scmp.eq.s32.totalorder %s27, 9
      %p114 = por %p112, %p113
      %p115 = scmp.ne.s32.totalorder %s107, %s110
      %p116 = scmp.eq.s32.totalorder %s27, 0
      %p117 = por %p115, %p116
      %p118 = scmp.ne.s32.totalorder %s107, %s110
      %p119 = scmp.eq.s32.totalorder %s32, 9
      %p120 = por %p118, %p119
      %p121 = scmp.ne.s32.totalorder %s110, %s111
      %p122 = scmp.eq.s32.totalorder %s32, 0
      %p123 = por %p121, %p122
      %p124 = scmp.ne.s32.totalorder %s110, %s111
      %p125 = scmp.eq.s32.totalorder %s33, 9
      %p126 = por %p124, %p125
      %p128 = scmp.ne.s32.totalorder %s111, %s127
      %p129 = scmp.eq.s32.totalorder %s33, 0
      %p130 = por %p128, %p129
      %s131 = ssub.s32 %s35, %s42
      %s132 = ssub.s32 %s34, %s46
      %s133 = sor.u32 %s131, %s132
      %p134 = scmp.eq.s32.totalorder %s133, 0
      %s136 = sadd.s32 %s135, 1
      %s137 = scalar_select %p134, %s135, %s136
      %p140 = pneg %p134
      %p141 = scmp.eq.s32.totalorder %s27, 9
      %p142 = por %p140, %p141
      %p143 = scmp.ne.s32.totalorder %s135, %s138
      %p144 = scmp.eq.s32.totalorder %s27, 0
      %p145 = por %p143, %p144
      %p146 = scmp.ne.s32.totalorder %s135, %s138
      %p147 = scmp.eq.s32.totalorder %s32, 9
      %p148 = por %p146, %p147
      %p149 = scmp.ne.s32.totalorder %s138, %s139
      %p150 = scmp.eq.s32.totalorder %s32, 0
      %p151 = por %p149, %p150
      %p152 = scmp.ne.s32.totalorder %s138, %s139
      %p153 = scmp.eq.s32.totalorder %s33, 9
      %p154 = por %p152, %p153
      %p156 = scmp.ne.s32.totalorder %s139, %s155
      %p157 = scmp.eq.s32.totalorder %s33, 0
      %p158 = por %p156, %p157
      %s159 = ssub.s32 %s35, %s42
      %s160 = ssub.s32 %s34, %s46
      %s161 = sor.u32 %s159, %s160
      %p162 = scmp.eq.s32.totalorder %s161, 0
      %s164 = sadd.s32 %s163, 1
      %s165 = scalar_select %p162, %s163, %s164
      %p168 = pneg %p162
      %p169 = scmp.eq.s32.totalorder %s27, 9
      %p170 = por %p168, %p169
      %p171 = scmp.ne.s32.totalorder %s163, %s166
      %p172 = scmp.eq.s32.totalorder %s27, 0
      %p173 = por %p171, %p172
      %p174 = scmp.ne.s32.totalorder %s163, %s166
      %p175 = scmp.eq.s32.totalorder %s32, 9
      %p176 = por %p174, %p175
      %p177 = scmp.ne.s32.totalorder %s166, %s167
      %p178 = scmp.eq.s32.totalorder %s32, 0
      %p179 = por %p177, %p178
      %p180 = scmp.ne.s32.totalorder %s166, %s167
      %p181 = scmp.eq.s32.totalorder %s33, 9
      %p182 = por %p180, %p181
      %p184 = scmp.ne.s32.totalorder %s167, %s183
      %p185 = scmp.eq.s32.totalorder %s33, 0
      %p186 = por %p184, %p185
      %s187 = ssub.s32 %s35, %s42
      %s188 = ssub.s32 %s34, %s46
      %s189 = sor.u32 %s187, %s188
      %p190 = scmp.eq.s32.totalorder %s189, 0
      %s192 = sadd.s32 %s191, 1
      %s193 = scalar_select %p190, %s191, %s192
      %p196 = pneg %p190
      %p197 = scmp.eq.s32.totalorder %s27, 9
      %p198 = por %p196, %p197
      %p199 = scmp.ne.s32.totalorder %s191, %s194
      %p200 = scmp.eq.s32.totalorder %s27, 0
      %p201 = por %p199, %p200
      %p202 = scmp.ne.s32.totalorder %s191, %s194
      %p203 = scmp.eq.s32.totalorder %s32, 9
      %p204 = por %p202, %p203
      %p205 = scmp.ne.s32.totalorder %s194, %s195
      %p206 = scmp.eq.s32.totalorder %s32, 0
      %p207 = por %p205, %p206
      %p208 = scmp.ne.s32.totalorder %s194, %s195
      %p209 = scmp.eq.s32.totalorder %s33, 9
      %p210 = por %p208, %p209
      %p212 = scmp.ne.s32.totalorder %s195, %s211
      %p213 = scmp.eq.s32.totalorder %s33, 0
      %p214 = por %p212, %p213
      %s215 = ssub.s32 %s35, %s42
      %s216 = ssub.s32 %s34, %s46
      %s217 = sor.u32 %s215, %s216
      %p218 = scmp.eq.s32.totalorder %s217, 0
      %s220 = sadd.s32 %s219, 1
      %s221 = scalar_select %p218, %s219, %s220
      %p224 = pneg %p218
      %p225 = scmp.eq.s32.totalorder %s27, 9
      %p226 = por %p224, %p225
      %p227 = scmp.ne.s32.totalorder %s219, %s222
      %p228 = scmp.eq.s32.totalorder %s27, 0
      %p229 = por %p227, %p228
      %p230 = scmp.ne.s32.totalorder %s219, %s222
      %p231 = scmp.eq.s32.totalorder %s32, 9
      %p232 = por %p230, %p231
      %p233 = scmp.ne.s32.totalorder %s222, %s223
      %p234 = scmp.eq.s32.totalorder %s32, 0
      %p235 = por %p233, %p234
      %p236 = scmp.ne.s32.totalorder %s222, %s223
      %p237 = scmp.eq.s32.totalorder %s33, 9
      %p238 = por %p236, %p237
      %p240 = scmp.ne.s32.totalorder %s223, %s239
      %p241 = scmp.eq.s32.totalorder %s33, 0
      %p242 = por %p240, %p241
      %p243 = scmp.le.s32.totalorder 1, %s27
      %p244 = scmp.lt.s32.totalorder %s27, 11
      %p245 = pnand %p243, %p244
      %p246 = pneg %p245
      // Predicated region
      $region9: #{tpu_custom_call.1} parent=5 // pred_check
        _
      $region10: #{tpu_custom_call.1} parent=5 // pred_check_branch
        %248 = sbr.rel (%p245) target = $region12
      $region11: #{tpu_custom_call.1} parent=5 // pred_region
        %s249 = ssub.s32 %s27, 1
      $region12: #{tpu_custom_call.1} parent=5 // pred_fallthru
        _
      %p250 = scmp.lt.s32.totalorder %s27, 10
      // Predicated region
      $region13: #{tpu_custom_call.1} parent=5 // pred_check
        %p251 = pneg %p250
      $region14: #{tpu_custom_call.1} parent=5 // pred_check_branch
        %253 = sbr.rel (%p251) target = $region16
      $region15: #{tpu_custom_call.1} parent=5 // pred_region
        // Predicated region
        $region17: #{tpu_custom_call.1} parent=15 // pred_check
          %p254 = pneg %p61
        $region18: #{tpu_custom_call.1} parent=15 // pred_check_branch
          %256 = sbr.rel (%p254) target = $region20
        $region19: #{tpu_custom_call.1} parent=15 // pred_region
          %s257 = sand.u32 %s51, 1
          %s258 = scalar_lea.sflag [#allocation3], %s257
          %s259 = sand.u32 %s51, 1
          %s260 = smul.addr %s259, 32
          %s261 = scalar_lea.vmem [#allocation2], %s260
          %s262 = smul.u32 4, %s35
          %s263 = ssub.s32 38, %s262
          %p264 = scmp.lt.s32.totalorder %s263, 4
          %s265 = scalar_select %p264, %s263, 4
          %s266 = smul.u32 128, %s265
          %s268 = ssub.s32 512, %s266
          %269 = vsyncadd %s258, %s268
          %p270 = scmp.ne.s32.totalorder 0, %s266
          %s271 = sadd.s32 %s34, %s262
          %s272 = smul.addr %s271, 128
          %s273 = scalar_lea.hbm %s0, %s272
          %s274 = smul.u32 8, %s265
          %s275 = sshll.u32 %s261, 4
          %s276 = int_to_ptr.vmem [resolvable:$true] %s275
          %s277 = sshll.u32 %s274, 4
          %281 = dma.hbm_to_vmem [thread:$0]  (%p270), %s273, %s277, %s276, %s258, 128, 128, 8
        $region20: #{tpu_custom_call.1} parent=15 // pred_fallthru
          _
        // Predicated region
        $region21: #{tpu_custom_call.1} parent=15 // pred_check
          %p282 = pneg %p89
        $region22: #{tpu_custom_call.1} parent=15 // pred_check_branch
          %284 = sbr.rel (%p282) target = $region24
        $region23: #{tpu_custom_call.1} parent=15 // pred_region
          %s285 = sand.u32 %s27, 1
          %s286 = scalar_lea.sflag [#allocation6], %s285
          %s287 = sand.u32 %s79, 1
          %s288 = smul.addr %s287, 32
          %s289 = scalar_lea.vmem [#allocation5], %s288
          %s290 = smul.u32 4, %s35
          %s291 = ssub.s32 38, %s290
          %p292 = scmp.lt.s32.totalorder %s291, 4
          %s293 = scalar_select %p292, %s291, 4
          %s294 = smul.u32 128, %s293
          %s296 = ssub.s32 512, %s294
          %297 = vsyncadd %s286, %s296
          %p298 = scmp.ne.s32.totalorder 0, %s294
          %s299 = sadd.s32 %s34, %s290
          %s300 = smul.addr %s299, 128
          %s301 = scalar_lea.hbm %s1, %s300
          %s302 = smul.u32 8, %s293
          %s303 = sshll.u32 %s289, 4
          %s304 = int_to_ptr.vmem [resolvable:$true] %s303
          %s305 = sshll.u32 %s302, 4
          %309 = dma.hbm_to_vmem [thread:$0]  (%p298), %s301, %s305, %s304, %s286, 128, 128, 8
        $region24: #{tpu_custom_call.1} parent=15 // pred_fallthru
          _
        // Predicated region
        $region25: #{tpu_custom_call.1} parent=15 // pred_check
          %p310 = pneg %p117
        $region26: #{tpu_custom_call.1} parent=15 // pred_check_branch
          %312 = sbr.rel (%p310) target = $region28
        $region27: #{tpu_custom_call.1} parent=15 // pred_region
          %s313 = sand.u32 %s27, 1
          %s314 = scalar_lea.sflag [#allocation6], %s313
          %s315 = sand.u32 %s107, 1
          %s316 = smul.addr %s315, 32
          %s317 = scalar_lea.vmem [#allocation7], %s316
          %s318 = smul.u32 4, %s35
          %s319 = ssub.s32 38, %s318
          %p320 = scmp.lt.s32.totalorder %s319, 4
          %s321 = scalar_select %p320, %s319, 4
          %s322 = smul.u32 128, %s321
          %s324 = ssub.s32 512, %s322
          %325 = vsyncadd %s314, %s324
          %p326 = scmp.ne.s32.totalorder 0, %s322
          %s327 = sadd.s32 %s34, %s318
          %s328 = smul.addr %s327, 128
          %s329 = scalar_lea.hbm %s2, %s328
          %s330 = smul.u32 8, %s321
          %s331 = sshll.u32 %s317, 4
          %s332 = int_to_ptr.vmem [resolvable:$true] %s331
          %s333 = sshll.u32 %s330, 4
          %337 = dma.hbm_to_vmem [thread:$0]  (%p326), %s329, %s333, %s332, %s314, 128, 128, 8
        $region28: #{tpu_custom_call.1} parent=15 // pred_fallthru
          _
        // Predicated region
        $region29: #{tpu_custom_call.1} parent=15 // pred_check
          %p338 = pneg %p145
        $region30: #{tpu_custom_call.1} parent=15 // pred_check_branch
          %340 = sbr.rel (%p338) target = $region32
        $region31: #{tpu_custom_call.1} parent=15 // pred_region
          %s341 = sand.u32 %s27, 1
          %s342 = scalar_lea.sflag [#allocation9], %s341
          %s343 = sand.u32 %s135, 1
          %s344 = smul.addr %s343, 32
          %s345 = scalar_lea.vmem [#allocation8], %s344
          %s346 = smul.u32 4, %s35
          %s347 = ssub.s32 38, %s346
          %p348 = scmp.lt.s32.totalorder %s347, 4
          %s349 = scalar_select %p348, %s347, 4
          %s350 = smul.u32 128, %s349
          %s352 = ssub.s32 512, %s350
          %353 = vsyncadd %s342, %s352
          %p354 = scmp.ne.s32.totalorder 0, %s350
          %s355 = sadd.s32 %s34, %s346
          %s356 = smul.addr %s355, 128
          %s357 = scalar_lea.hbm %s3, %s356
          %s358 = smul.u32 8, %s349
          %s359 = sshll.u32 %s345, 4
          %s360 = int_to_ptr.vmem [resolvable:$true] %s359
          %s361 = sshll.u32 %s358, 4
          %365 = dma.hbm_to_vmem [thread:$0]  (%p354), %s357, %s361, %s360, %s342, 128, 128, 8
        $region32: #{tpu_custom_call.1} parent=15 // pred_fallthru
          _
        // Predicated region
        $region33: #{tpu_custom_call.1} parent=15 // pred_check
          %p366 = pneg %p173
        $region34: #{tpu_custom_call.1} parent=15 // pred_check_branch
          %368 = sbr.rel (%p366) target = $region36
        $region35: #{tpu_custom_call.1} parent=15 // pred_region
          %s369 = sand.u32 %s27, 1
          %s370 = scalar_lea.sflag [#allocation9], %s369
          %s371 = sand.u32 %s163, 1
          %s372 = smul.addr %s371, 32
          %s373 = scalar_lea.vmem [#allocation10], %s372
          %s374 = smul.u32 4, %s35
          %s375 = ssub.s32 38, %s374
          %p376 = scmp.lt.s32.totalorder %s375, 4
          %s377 = scalar_select %p376, %s375, 4
          %s378 = smul.u32 128, %s377
          %s380 = ssub.s32 512, %s378
          %381 = vsyncadd %s370, %s380
          %p382 = scmp.ne.s32.totalorder 0, %s378
          %s383 = sadd.s32 %s34, %s374
          %s384 = smul.addr %s383, 128
          %s385 = scalar_lea.hbm %s4, %s384
          %s386 = smul.u32 8, %s377
          %s387 = sshll.u32 %s373, 4
          %s388 = int_to_ptr.vmem [resolvable:$true] %s387
          %s389 = sshll.u32 %s386, 4
          %393 = dma.hbm_to_vmem [thread:$0]  (%p382), %s385, %s389, %s388, %s370, 128, 128, 8
        $region36: #{tpu_custom_call.1} parent=15 // pred_fallthru
          _
        // Predicated region
        $region37: #{tpu_custom_call.1} parent=15 // pred_check
          %p394 = pneg %p201
        $region38: #{tpu_custom_call.1} parent=15 // pred_check_branch
          %396 = sbr.rel (%p394) target = $region40
        $region39: #{tpu_custom_call.1} parent=15 // pred_region
          %s397 = sand.u32 %s191, 1
          %s398 = scalar_lea.sflag [#allocation12], %s397
          %s399 = sand.u32 %s191, 1
          %s400 = smul.addr %s399, 32
          %s401 = scalar_lea.vmem [#allocation11], %s400
          %s402 = smul.u32 4, %s35
          %s403 = ssub.s32 38, %s402
          %p404 = scmp.lt.s32.totalorder %s403, 4
          %s405 = scalar_select %p404, %s403, 4
          %s406 = smul.u32 128, %s405
          %s408 = ssub.s32 512, %s406
          %409 = vsyncadd %s398, %s408
          %p410 = scmp.ne.s32.totalorder 0, %s406
          %s411 = sadd.s32 %s34, %s402
          %s412 = smul.addr %s411, 128
          %s413 = scalar_lea.hbm %s5, %s412
          %s414 = smul.u32 8, %s405
          %s415 = sshll.u32 %s401, 4
          %s416 = int_to_ptr.vmem [resolvable:$true] %s415
          %s417 = sshll.u32 %s414, 4
          %421 = dma.hbm_to_vmem [thread:$0]  (%p410), %s413, %s417, %s416, %s398, 128, 128, 8
        $region40: #{tpu_custom_call.1} parent=15 // pred_fallthru
          _
      $region16: #{tpu_custom_call.1} parent=5 // pred_fallthru
        _
      %p422 = scmp.le.s32.totalorder 1, %s27
      %p423 = scmp.lt.s32.totalorder %s27, 11
      %p424 = pnand %p422, %p423
      %p425 = pneg %p424
      // Predicated region
      $region41: #{tpu_custom_call.1} parent=5 // pred_check
        _
      $region42: #{tpu_custom_call.1} parent=5 // pred_check_branch
        %427 = sbr.rel (%p424) target = $region44
      $region43: #{tpu_custom_call.1} parent=5 // pred_region
        %s428 = ssub.s32 %s27, 1
        %s429 = sand.u32 %s54, 1
        %s430 = scalar_lea.sflag [#allocation3], %s429
        %s431 = sand.u32 %s54, 1
        %s432 = smul.addr %s431, 32
        %s433 = scalar_lea.vmem [#allocation2], %s432
        // Predicated region
        $region45: #{tpu_custom_call.1} parent=43 // pred_check
          %p434 = pneg %p67
        $region46: #{tpu_custom_call.1} parent=43 // pred_check_branch
          %436 = sbr.rel (%p434) target = $region48
        $region47: #{tpu_custom_call.1} parent=43 // pred_region
          %437 = dma.done %s430, 512
        $region48: #{tpu_custom_call.1} parent=43 // pred_fallthru
          _
        %s438 = sand.u32 %s32, 1
        %s439 = scalar_lea.sflag [#allocation6], %s438
        %s440 = sand.u32 %s82, 1
        %s441 = smul.addr %s440, 32
        %s442 = scalar_lea.vmem [#allocation5], %s441
        // Predicated region
        $region49: #{tpu_custom_call.1} parent=43 // pred_check
          %p443 = pneg %p95
        $region50: #{tpu_custom_call.1} parent=43 // pred_check_branch
          %445 = sbr.rel (%p443) target = $region52
        $region51: #{tpu_custom_call.1} parent=43 // pred_region
          %446 = dma.done %s439, 512
        $region52: #{tpu_custom_call.1} parent=43 // pred_fallthru
          _
        %s447 = sand.u32 %s32, 1
        %s448 = scalar_lea.sflag [#allocation6], %s447
        %s449 = sand.u32 %s110, 1
        %s450 = smul.addr %s449, 32
        %s451 = scalar_lea.vmem [#allocation7], %s450
        // Predicated region
        $region53: #{tpu_custom_call.1} parent=43 // pred_check
          %p452 = pneg %p123
        $region54: #{tpu_custom_call.1} parent=43 // pred_check_branch
          %454 = sbr.rel (%p452) target = $region56
        $region55: #{tpu_custom_call.1} parent=43 // pred_region
          %455 = dma.done %s448, 512
        $region56: #{tpu_custom_call.1} parent=43 // pred_fallthru
          _
        %s456 = sand.u32 %s32, 1
        %s457 = scalar_lea.sflag [#allocation9], %s456
        %s458 = sand.u32 %s138, 1
        %s459 = smul.addr %s458, 32
        %s460 = scalar_lea.vmem [#allocation8], %s459
        // Predicated region
        $region57: #{tpu_custom_call.1} parent=43 // pred_check
          %p461 = pneg %p151
        $region58: #{tpu_custom_call.1} parent=43 // pred_check_branch
          %463 = sbr.rel (%p461) target = $region60
        $region59: #{tpu_custom_call.1} parent=43 // pred_region
          %464 = dma.done %s457, 512
        $region60: #{tpu_custom_call.1} parent=43 // pred_fallthru
          _
        %s465 = sand.u32 %s32, 1
        %s466 = scalar_lea.sflag [#allocation9], %s465
        %s467 = sand.u32 %s166, 1
        %s468 = smul.addr %s467, 32
        %s469 = scalar_lea.vmem [#allocation10], %s468
        // Predicated region
        $region61: #{tpu_custom_call.1} parent=43 // pred_check
          %p470 = pneg %p179
        $region62: #{tpu_custom_call.1} parent=43 // pred_check_branch
          %472 = sbr.rel (%p470) target = $region64
        $region63: #{tpu_custom_call.1} parent=43 // pred_region
          %473 = dma.done %s466, 512
        $region64: #{tpu_custom_call.1} parent=43 // pred_fallthru
          _
        %s474 = sand.u32 %s194, 1
        %s475 = scalar_lea.sflag [#allocation12], %s474
        %s476 = sand.u32 %s194, 1
        %s477 = smul.addr %s476, 32
        %s478 = scalar_lea.vmem [#allocation11], %s477
        // Predicated region
        $region65: #{tpu_custom_call.1} parent=43 // pred_check
          %p479 = pneg %p207
        $region66: #{tpu_custom_call.1} parent=43 // pred_check_branch
          %481 = sbr.rel (%p479) target = $region68
        $region67: #{tpu_custom_call.1} parent=43 // pred_region
          %482 = dma.done %s475, 512
        $region68: #{tpu_custom_call.1} parent=43 // pred_fallthru
          _
        %s483 = sand.u32 %s54, 1
        %s484 = scalar_lea.sflag [#allocation3], %s483
        %s485 = sand.u32 %s54, 1
        %s486 = smul.addr %s485, 32
        %s487 = scalar_lea.vmem [#allocation2], %s486
        %p488 = pneg %p67
        %p489 = pneg %p64
        %s490 = sand.u32 %s32, 1
        %s491 = scalar_lea.sflag [#allocation6], %s490
        %s492 = sand.u32 %s82, 1
        %s493 = smul.addr %s492, 32
        %s494 = scalar_lea.vmem [#allocation5], %s493
        %p495 = pneg %p95
        %p496 = pneg %p92
        %s497 = sand.u32 %s32, 1
        %s498 = scalar_lea.sflag [#allocation6], %s497
        %s499 = sand.u32 %s110, 1
        %s500 = smul.addr %s499, 32
        %s501 = scalar_lea.vmem [#allocation7], %s500
        %p502 = pneg %p123
        %p503 = pneg %p120
        %s504 = sand.u32 %s32, 1
        %s505 = scalar_lea.sflag [#allocation9], %s504
        %s506 = sand.u32 %s138, 1
        %s507 = smul.addr %s506, 32
        %s508 = scalar_lea.vmem [#allocation8], %s507
        %p509 = pneg %p151
        %p510 = pneg %p148
        %s511 = sand.u32 %s32, 1
        %s512 = scalar_lea.sflag [#allocation9], %s511
        %s513 = sand.u32 %s166, 1
        %s514 = smul.addr %s513, 32
        %s515 = scalar_lea.vmem [#allocation10], %s514
        %p516 = pneg %p179
        %p517 = pneg %p176
        %s518 = sand.u32 %s194, 1
        %s519 = scalar_lea.sflag [#allocation12], %s518
        %s520 = sand.u32 %s194, 1
        %s521 = smul.addr %s520, 32
        %s522 = scalar_lea.vmem [#allocation11], %s521
        %p523 = pneg %p207
        %p524 = pneg %p204
        %p525 = pneg %p235
        %p526 = pneg %p232
        %s527 = sand.u32 %s222, 1
        %s528 = scalar_lea.sflag [#allocation4], %s527
        %s529 = sand.u32 %s222, 1
        %s530 = smul.addr %s529, 32
        %s531 = scalar_lea.vmem [#allocation13], %s530
        %s532 = smul.u32 4, %s37
        %s533 = ssub.s32 38, %s532
        %p534 = scmp.lt.s32.totalorder %s533, 4
        %s535 = scalar_select %p534, %s533, 4
        %s536 = smul.u32 128, %s535
        %s537 = smul.u32 4, %s37
        %s538 = ssub.s32 38, %s537
        %p539 = scmp.lt.s32.totalorder %s538, 4
        %s540 = scalar_select %p539, %s538, 4
        %s541 = smul.u32 128, %s540
        %s542 = smul.u32 4, %s37
        %s543 = ssub.s32 38, %s542
        %p544 = scmp.lt.s32.totalorder %s543, 4
        %s545 = scalar_select %p544, %s543, 4
        %s546 = smul.u32 128, %s545
        %s547 = smul.u32 4, %s37
        %s548 = ssub.s32 38, %s547
        %p549 = scmp.lt.s32.totalorder %s548, 4
        %s550 = scalar_select %p549, %s548, 4
        %s551 = smul.u32 128, %s550
        %s552 = smul.u32 4, %s37
        %s553 = ssub.s32 38, %s552
        %p554 = scmp.lt.s32.totalorder %s553, 4
        %s555 = scalar_select %p554, %s553, 4
        %s556 = smul.u32 128, %s555
        %s557 = smul.u32 4, %s37
        %s558 = ssub.s32 38, %s557
        %p559 = scmp.lt.s32.totalorder %s558, 4
        %s560 = scalar_select %p559, %s558, 4
        %s561 = smul.u32 128, %s560
        %s562 = smul.u32 4, %s37
        %s563 = ssub.s32 38, %s562
        %p564 = scmp.lt.s32.totalorder %s563, 4
        %s565 = scalar_select %p564, %s563, 4
        %s566 = smul.u32 128, %s565
        %v567 = vld [vmem:[%s433] sm:$0xff]
        %v568 = vld [vmem:[%s433 + $0x8] sm:$0xff]
        %v569 = vld [vmem:[%s433 + $0x10] sm:$0xff]
        %v570 = vld [vmem:[%s433 + $0x18] sm:$0xff]
        %v571 = vld [vmem:[%s442] sm:$0xff]
        %v572 = vld [vmem:[%s442 + $0x8] sm:$0xff]
        %v573 = vld [vmem:[%s442 + $0x10] sm:$0xff]
        %v574 = vld [vmem:[%s442 + $0x18] sm:$0xff]
        %v575 = vld [vmem:[%s451] sm:$0xff]
        %v576 = vld [vmem:[%s451 + $0x8] sm:$0xff]
        %v577 = vld [vmem:[%s451 + $0x10] sm:$0xff]
        %v578 = vld [vmem:[%s451 + $0x18] sm:$0xff]
        %v579 = vld [vmem:[%s460] sm:$0xff]
        %v580 = vld [vmem:[%s460 + $0x8] sm:$0xff]
        %v581 = vld [vmem:[%s460 + $0x10] sm:$0xff]
        %v582 = vld [vmem:[%s460 + $0x18] sm:$0xff]
        %v583 = vld [vmem:[%s469] sm:$0xff]
        %v584 = vld [vmem:[%s469 + $0x8] sm:$0xff]
        %v585 = vld [vmem:[%s469 + $0x10] sm:$0xff]
        %v586 = vld [vmem:[%s469 + $0x18] sm:$0xff]
        %v587 = vld [vmem:[%s478] sm:$0xff]
        %v588 = vld [vmem:[%s478 + $0x8] sm:$0xff]
        %v589 = vld [vmem:[%s478 + $0x10] sm:$0xff]
        %v590 = vld [vmem:[%s478 + $0x18] sm:$0xff]
        %v591 = vsub.f32 %v567, %v583
        %v592 = vsub.f32 %v568, %v584
        %v593 = vsub.f32 %v569, %v585
        %v594 = vsub.f32 %v570, %v586
        %v595 = vmul.f32 %v579, %v591
        %v596 = vmul.f32 %v580, %v592
        %v597 = vmul.f32 %v581, %v593
        %v598 = vmul.f32 %v582, %v594
        %v599 = vmax.f32 %v595, 0.0
        %v600 = vmax.f32 %v596, 0.0
        %v601 = vmax.f32 %v597, 0.0
        %v602 = vmax.f32 %v598, 0.0
        %v603 = vand.u32 2147483647, %v595
        %v604 = vand.u32 2147483647, %v596
        %v605 = vand.u32 2147483647, %v597
        %v606 = vand.u32 2147483647, %v598
        %v607 = vsub.f32 0.0, %v603
        %v608 = vsub.f32 0.0, %v604
        %v609 = vsub.f32 0.0, %v605
        %v610 = vsub.f32 0.0, %v606
        %v611 = vmul.f32 %v607, 1.442695
        %v612 = vpow.pop %v611
        %v613 = vmul.f32 %v608, 1.442695
        %v614 = vpow.pop %v613
        %v615 = vmul.f32 %v609, 1.442695
        %v616 = vpow.pop %v615
        %v617 = vmul.f32 %v610, 1.442695
        %v618 = vpow.pop %v617
        %v619 = vadd.f32 %v612, 1.0
        %v620 = vlog2.pop %v619
        %v621 = vmul.f32 %v620, 0.6931472
        %v622 = vmul.f32 -0.5, %v612
        %v623 = vadd.f32 %v622, 1.0
        %v624 = vmul.f32 %v623, %v612
        %v625 = vand.u32 2147483647, %v612
        %vm626 = vcmp.lt.f32.partialorder %v625, 0.0004427343
        %v627 = vsel %vm626, %v624, %v621
        %v628 = vadd.f32 %v614, 1.0
        %v629 = vlog2.pop %v628
        %v630 = vmul.f32 %v629, 0.6931472
        %v631 = vmul.f32 -0.5, %v614
        %v632 = vadd.f32 %v631, 1.0
        %v633 = vmul.f32 %v632, %v614
        %v634 = vand.u32 2147483647, %v614
        %vm635 = vcmp.lt.f32.partialorder %v634, 0.0004427343
        %v636 = vsel %vm635, %v633, %v630
        %v637 = vadd.f32 %v616, 1.0
        %v638 = vlog2.pop %v637
        %v639 = vmul.f32 %v638, 0.6931472
        %v640 = vmul.f32 -0.5, %v616
        %v641 = vadd.f32 %v640, 1.0
        %v642 = vmul.f32 %v641, %v616
        %v643 = vand.u32 2147483647, %v616
        %vm644 = vcmp.lt.f32.partialorder %v643, 0.0004427343
        %v645 = vsel %vm644, %v642, %v639
        %v646 = vadd.f32 %v618, 1.0
        %v647 = vlog2.pop %v646
        %v648 = vmul.f32 %v647, 0.6931472
        %v649 = vmul.f32 -0.5, %v618
        %v650 = vadd.f32 %v649, 1.0
        %v651 = vmul.f32 %v650, %v618
        %v652 = vand.u32 2147483647, %v618
        %vm653 = vcmp.lt.f32.partialorder %v652, 0.0004427343
        %v654 = vsel %vm653, %v651, %v648
        %v655 = vadd.f32 %v599, %v627
        %v656 = vadd.f32 %v600, %v636
        %v657 = vadd.f32 %v601, %v645
        %v658 = vadd.f32 %v602, %v654
        %v659 = vsub.f32 %v575, %v571
        %v660 = vsub.f32 %v576, %v572
        %v661 = vsub.f32 %v577, %v573
        %v662 = vsub.f32 %v578, %v574
        %v663 = vrcp.pop %v579
        %v664 = vmul.f32 %v659, %v663
        %v665 = vrcp.pop %v580
        %v666 = vmul.f32 %v660, %v665
        %v667 = vrcp.pop %v581
        %v668 = vmul.f32 %v661, %v667
        %v669 = vrcp.pop %v582
        %v670 = vmul.f32 %v662, %v669
        %v671 = vmul.f32 %v571, %v591
        %v672 = vmul.f32 %v572, %v592
        %v673 = vmul.f32 %v573, %v593
        %v674 = vmul.f32 %v574, %v594
        %v675 = vadd.f32 %v671, %v587
        %v676 = vadd.f32 %v672, %v588
        %v677 = vadd.f32 %v673, %v589
        %v678 = vadd.f32 %v674, %v590
        %v679 = vmul.f32 %v664, %v655
        %v680 = vmul.f32 %v666, %v656
        %v681 = vmul.f32 %v668, %v657
        %v682 = vmul.f32 %v670, %v658
        %v683 = vadd.f32 %v675, %v679
        %v684 = vadd.f32 %v676, %v680
        %v685 = vadd.f32 %v677, %v681
        %v686 = vadd.f32 %v678, %v682
        %687 = vst [vmem:[%s531] sm:$0xff] %v683
        %688 = vst [vmem:[%s531 + $0x8] sm:$0xff] %v684
        %689 = vst [vmem:[%s531 + $0x10] sm:$0xff] %v685
        %690 = vst [vmem:[%s531 + $0x18] sm:$0xff] %v686
        %s691 = sand.u32 %s222, 1
        %s692 = scalar_lea.sflag [#allocation4], %s691
        %s693 = sand.u32 %s222, 1
        %s694 = smul.addr %s693, 32
        %s695 = scalar_lea.vmem [#allocation13], %s694
        // Predicated region
        $region69: #{tpu_custom_call.1} parent=43 // pred_check
          %p696 = pneg %p232
        $region70: #{tpu_custom_call.1} parent=43 // pred_check_branch
          %698 = sbr.rel (%p696) target = $region72
        $region71: #{tpu_custom_call.1} parent=43 // pred_region
          %s699 = smul.u32 4, %s37
          %s700 = ssub.s32 38, %s699
          %p701 = scmp.lt.s32.totalorder %s700, 4
          %s702 = scalar_select %p701, %s700, 4
          %s703 = smul.u32 128, %s702
          %s705 = ssub.s32 512, %s703
          %706 = vsyncadd %s692, %s705
          %p707 = scmp.ne.s32.totalorder 0, %s703
          %s708 = sadd.s32 %s36, %s699
          %s709 = smul.addr %s708, 128
          %s710 = scalar_lea.hbm %s6, %s709
          %s711 = smul.u32 8, %s702
          %s712 = sshll.u32 %s695, 4
          %s713 = int_to_ptr.vmem [resolvable:$true] %s712
          %s714 = sshll.u32 %s711, 4
          %718 = dma.vmem_to_hbm [thread:$0]  (%p707), %s713, %s714, %s710, %s692, 128, 128, 8
        $region72: #{tpu_custom_call.1} parent=43 // pred_fallthru
          _
      $region44: #{tpu_custom_call.1} parent=5 // pred_fallthru
        _
      %p719 = scmp.le.s32.totalorder 2, %s27
      // Predicated region
      $region73: #{tpu_custom_call.1} parent=5 // pred_check
        %p720 = pneg %p719
      $region74: #{tpu_custom_call.1} parent=5 // pred_check_branch
        %722 = sbr.rel (%p720) target = $region76
      $region75: #{tpu_custom_call.1} parent=5 // pred_region
        %s723 = ssub.s32 %s27, 2
        // Predicated region
        $region77: #{tpu_custom_call.1} parent=75 // pred_check
          %p724 = pneg %p238
        $region78: #{tpu_custom_call.1} parent=75 // pred_check_branch
          %726 = sbr.rel (%p724) target = $region80
        $region79: #{tpu_custom_call.1} parent=75 // pred_region
          %s727 = sand.u32 %s223, 1
          %s728 = scalar_lea.sflag [#allocation4], %s727
          %s729 = sand.u32 %s223, 1
          %s730 = smul.addr %s729, 32
          %s731 = scalar_lea.vmem [#allocation13], %s730
          %732 = dma.done %s728, 512
        $region80: #{tpu_custom_call.1} parent=75 // pred_fallthru
          _
      $region76: #{tpu_custom_call.1} parent=5 // pred_fallthru
        _
    $region6: #{tpu_custom_call.1} parent=1 // loop_footer
      %s31 = sadd.s32 1, %s27
    $region7: #{tpu_custom_call.1} parent=1 // loop_footer_branch
      %26 = sbr.rel target = $region3
    $region8: #{tpu_custom_call.1} parent=1 // loop_exit
      _
    %733 = vsyncpa [#allocation3], 1
    %s734 = scalar_lea.sflag [#allocation3], 1
    %735 = vsyncpa %s734, 1
    %736 = vsyncpa [#allocation6], 1
    %s737 = scalar_lea.sflag [#allocation6], 1
    %738 = vsyncpa %s737, 1
    %739 = vsyncpa [#allocation9], 1
    %s740 = scalar_lea.sflag [#allocation9], 1
    %741 = vsyncpa %s740, 1
    %742 = vsyncpa [#allocation12], 1
    %s743 = scalar_lea.sflag [#allocation12], 1
    %744 = vsyncpa %s743, 1
    %745 = vsyncpa [#allocation4], 1
    %s746 = scalar_lea.sflag [#allocation4], 1
    %747 = vsyncpa %s746, 1

</llo_original>
